<compile_context>
chip_gen: v7x
topology: tpu7x:2x2x1
jax: 0.10.0
libtpu: 0.0.40
codegen_flags: <defaults>
</compile_context>

<pallas_src>
import math
import functools

import jax
import jax.numpy as jnp
from jax import lax
from jax.experimental import pallas as pl
from jax.experimental.pallas import tpu as pltpu


LOG_STD_MAX = 2.0
LOG_STD_MIN = -20.0
_HALF_LOG_2PI = 0.5 * math.log(2.0 * math.pi)
_LOG_2 = math.log(2.0)
LANE = 128  # TPU lane width; head halves and the output slab are padded to it.


def _round_up(x, m):
    return ((x + m - 1) // m) * m


# ----------------------------------------------------------------------------
# Kernel
# ----------------------------------------------------------------------------
def _actor_kernel(
    state_ref,            # (Bt, S)            f32
    w1_ref, b1_ref,       # (S, H1) mxu_dtype, (1, H1) f32
    w2_ref, b2_ref,       # (H1, H2) mxu_dtype, (1, H2) f32
    wh_ref, bh_ref,       # fused+lane-padded heads: (H2, 2*LANE), (1, 2*LANE)
    *rest,                # [eps_ref (Bt, LANE)], out_ref (Bt, LANE)
    action_dim,
    deterministic,
    with_logprob,
):
    if deterministic:
        eps_ref = None
        (out_ref,) = rest
    else:
        eps_ref, out_ref = rest

    x = state_ref[...]

    # a_net: Linear -> ReLU -> Linear -> ReLU (output_activation is also ReLU).
    # bf16 into the MXU, f32 accumulate; biases/activations stay f32.
    h1 = jnp.dot(x.astype(w1_ref.dtype), w1_ref[...],
                 preferred_element_type=jnp.float32) + b1_ref[...]
    h1 = jnp.maximum(h1, 0.0)
    h2 = jnp.dot(h1.astype(w2_ref.dtype), w2_ref[...],
                 preferred_element_type=jnp.float32) + b2_ref[...]
    net_out = jnp.maximum(h2, 0.0)

    # Fused mu|log_std head, one MXU push. Split is at the 128-lane boundary.
    head = jnp.dot(net_out.astype(wh_ref.dtype), wh_ref[...],
                   preferred_element_type=jnp.float32) + bh_ref[...]
    mu = head[:, :LANE]
    log_std = jnp.clip(head[:, LANE:], LOG_STD_MIN, LOG_STD_MAX)

    if deterministic:
        u = mu
    else:
        eps = eps_ref[...]                       # (Bt, LANE); extra lanes ignored
        u = mu + jnp.exp(log_std) * eps

    a = jnp.tanh(u)

    bt = out_ref.shape[0]
    lane = lax.broadcasted_iota(jnp.int32, (bt, LANE), 1)
    out = jnp.where(lane < action_dim, a, 0.0)   # action in lanes [0, A)

    if with_logprob:
        # Normal(mu, std).log_prob(u): z = (u - mu)/std == eps by construction.
        if deterministic:
            normal_logp = -log_std - _HALF_LOG_2PI
        else:
            normal_logp = -0.5 * eps * eps - log_std - _HALF_LOG_2PI
        # tanh correction: 2*(log2 - u - softplus(-2u)); softplus via logaddexp.
        correction = 2.0 * (_LOG_2 - u - jnp.logaddexp(0.0, -2.0 * u))
        per_lane = jnp.where(lane < action_dim, normal_logp - correction, 0.0)
        logp = jnp.sum(per_lane, axis=1, keepdims=True)      # (Bt, 1)
        out = jnp.where(lane == action_dim, logp, out)        # logp in lane A

    out_ref[...] = out.astype(out_ref.dtype)


# ----------------------------------------------------------------------------
# One-time parameter preparation (head fusion, lane padding, bf16 cast)
# ----------------------------------------------------------------------------
def prepare_actor_params(raw, *, mxu_dtype=jnp.bfloat16):
    """Fuse/pad/cast the PyTorch-style params once, off the forward hot path.

    raw: dict with w1,b1,w2,b2,wmu,bmu,wls,bls (weights (in,out), biases (1,out)).
    """
    A = raw["wmu"].shape[1]
    assert A + 1 <= LANE, "action_dim must fit (with logp) inside one lane tile"

    def pad_lanes(m):
        p = LANE - m.shape[1]
        return jnp.pad(m, ((0, 0), (0, p))) if p else m

    wh = jnp.concatenate([pad_lanes(raw["wmu"]), pad_lanes(raw["wls"])], axis=1)
    bh = jnp.concatenate([pad_lanes(raw["bmu"]), pad_lanes(raw["bls"])], axis=1)

    return {
        "w1": raw["w1"].astype(mxu_dtype),
        "b1": raw["b1"].astype(jnp.float32),
        "w2": raw["w2"].astype(mxu_dtype),
        "b2": raw["b2"].astype(jnp.float32),
        "wh": wh.astype(mxu_dtype),            # (H2, 2*LANE)
        "bh": bh.astype(jnp.float32),          # (1, 2*LANE)
        "action_dim": A,
    }


# ----------------------------------------------------------------------------
# Forward wrapper
# ----------------------------------------------------------------------------
def actor_forward(state, kparams, eps=None, *, deterministic, with_logprob,
                  block_b=512):
    """Pallas Actor forward.

    state: (B, state_dim) f32
    kparams: output of prepare_actor_params()
    eps: standard-normal noise, shape (B, action_dim) or already (B, 128)
         (the latter avoids a per-call pad). Required unless deterministic.
    Returns (a (B, A) f32, logp (B, 1) f32 or None).
    """
    B, S = state.shape
    A = kparams["action_dim"]
    H1 = kparams["w1"].shape[1]
    H2 = kparams["w2"].shape[1]

    # Batch tile: multiple of 8 sublanes, capped at block_b (large by default —
    # the kernel is overhead-bound, fewer grid steps is better).
    b_tile = min(block_b, _round_up(B, 8))
    B_pad = _round_up(B, b_tile)
    pad = B_pad - B
    state_p = jnp.pad(state, ((0, pad), (0, 0))) if pad else state

    def row_spec(d):
        return pl.BlockSpec((b_tile, d), lambda i: (i, 0))

    def full_spec(arr):
        # Whole array resident in VMEM across all grid steps.
        return pl.BlockSpec(arr.shape, lambda i: (0,) * arr.ndim)

    inputs = [state_p, kparams["w1"], kparams["b1"], kparams["w2"],
              kparams["b2"], kparams["wh"], kparams["bh"]]
    in_specs = [
        row_spec(S),
        full_spec(kparams["w1"]), full_spec(kparams["b1"]),
        full_spec(kparams["w2"]), full_spec(kparams["b2"]),
        full_spec(kparams["wh"]), full_spec(kparams["bh"]),
    ]

    if not deterministic:
        if eps is None:
            raise ValueError("eps must be provided when deterministic=False")
        if eps.shape[1] < LANE:
            eps = jnp.pad(eps, ((0, 0), (0, LANE - eps.shape[1])))
        eps_p = jnp.pad(eps, ((0, pad), (0, 0))) if pad else eps
        inputs.append(eps_p)
        in_specs.append(row_spec(LANE))

    # Single lane-dense output slab: action in lanes [0, A), logp in lane A.
    out_shape = jax.ShapeDtypeStruct((B_pad, LANE), jnp.float32)
    out_spec = row_spec(LANE)

    grid = (B_pad // b_tile,)

    w_bytes = (S * H1 + H1 * H2 + H2 * 2 * LANE) * kparams["w1"].dtype.itemsize
    b_bytes = 4 * (H1 + H2 + 2 * LANE)
    flops = 2 * B_pad * (S * H1 + H1 * H2 + H2 * 2 * LANE)
    transcendentals = B_pad * LANE * (4 if with_logprob else
                                      (1 if deterministic else 2))
    bytes_accessed = (
        4 * B_pad * S + w_bytes + b_bytes
        + (0 if deterministic else 4 * B_pad * LANE)
        + 4 * B_pad * LANE
    )

    kernel = functools.partial(
        _actor_kernel,
        action_dim=A,
        deterministic=deterministic,
        with_logprob=with_logprob,
    )

    slab = pl.pallas_call(
        kernel,
        grid=grid,
        in_specs=in_specs,
        out_specs=out_spec,
        out_shape=out_shape,
        compiler_params=pltpu.CompilerParams(
            dimension_semantics=("parallel",),
            vmem_limit_bytes=32 * 1024 * 1024,
        ),
        cost_estimate=pl.CostEstimate(
            flops=flops,
            transcendentals=transcendentals,
            bytes_accessed=bytes_accessed,
        ),
    )(*inputs)

    a = slab[:B, :A]
    logp = slab[:B, A:A + 1] if with_logprob else None
    return a, logp


# ----------------------------------------------------------------------------
# Init + pure-JAX reference (for the self-check)
# ----------------------------------------------------------------------------
def init_actor_params(key, state_dim, action_dim, hid_shape):
    """Deterministic init mimicking torch.nn.Linear default (U[-1/sqrt(fan_in), ..])."""
    layers = [state_dim] + list(hid_shape)
    params = {}

    def linear(key, fan_in, fan_out):
        kw, kb = jax.random.split(key)
        bound = 1.0 / math.sqrt(fan_in)
        w = jax.random.uniform(kw, (fan_in, fan_out), jnp.float32, -bound, bound)
        b = jax.random.uniform(kb, (1, fan_out), jnp.float32, -bound, bound)
        return w, b

    keys = jax.random.split(key, len(layers) + 1)
    params["w1"], params["b1"] = linear(keys[0], layers[0], layers[1])
    params["w2"], params["b2"] = linear(keys[1], layers[1], layers[2])
    params["wmu"], params["bmu"] = linear(keys[2], layers[-1], action_dim)
    params["wls"], params["bls"] = linear(keys[3], layers[-1], action_dim)
    return params


def actor_reference(state, params, eps, *, deterministic, with_logprob):
    """Pure-JAX f32 reference of the PyTorch forward."""
    h1 = jnp.maximum(state @ params["w1"] + params["b1"], 0.0)
    net_out = jnp.maximum(h1 @ params["w2"] + params["b2"], 0.0)
    mu = net_out @ params["wmu"] + params["bmu"]
    log_std = jnp.clip(net_out @ params["wls"] + params["bls"], LOG_STD_MIN, LOG_STD_MAX)
    std = jnp.exp(log_std)
    u = mu if deterministic else mu + std * eps
    a = jnp.tanh(u)
    if not with_logprob:
        return a, None
    z = (u - mu) / std
    normal_logp = -0.5 * z * z - log_std - _HALF_LOG_2PI
    corr = 2.0 * (_LOG_2 - u - jnp.logaddexp(0.0, -2.0 * u))
    logp = jnp.sum(normal_logp, axis=1, keepdims=True) - jnp.sum(corr, axis=1, keepdims=True)
    return a, logp


if __name__ == "__main__":
    batch = 8
    state_dim = 16
    hid_shape = (32, 32)
    action_dim = 4

    key = jax.random.PRNGKey(0)
    k_params, k_state, k_eps = jax.random.split(key, 3)

    raw = init_actor_params(k_params, state_dim, action_dim, hid_shape)
    kparams = prepare_actor_params(raw)          # one-time fuse / pad / bf16 cast

    state = jax.random.normal(k_state, (batch, state_dim), jnp.float32)
    # Generate noise already 128-lane wide so the forward never has to pad eps;
    # only the first `action_dim` lanes are semantically used.
    eps_full = jax.random.normal(k_eps, (batch, LANE), jnp.float32)
    eps = eps_full[:, :action_dim]

    # bf16 MXU inputs -> loosened tolerances vs the f32 reference.
    A_TOL = 3e-2
    LP_ATOL, LP_RTOL = 2e-1, 5e-2

    # stochastic path with log-prob
    a, logp = actor_forward(state, kparams, eps_full,
                            deterministic=False, with_logprob=True)
    a = jax.block_until_ready(a)
    logp = jax.block_until_ready(logp)
    a_ref, logp_ref = actor_reference(state, raw, eps,
                                      deterministic=False, with_logprob=True)
    assert a.shape == (batch, action_dim) and logp.shape == (batch, 1)
    assert jnp.allclose(a, a_ref, atol=A_TOL, rtol=A_TOL)
    assert jnp.allclose(logp, logp_ref, atol=LP_ATOL, rtol=LP_RTOL)

    # deterministic path without log-prob (no eps input, no logp work in-kernel)
    a_det, logp_none = actor_forward(state, kparams,
                                     deterministic=True, with_logprob=False)
    a_det = jax.block_until_ready(a_det)
    a_det_ref, _ = actor_reference(state, raw, eps,
                                   deterministic=True, with_logprob=False)
    assert logp_none is None
    assert jnp.allclose(a_det, a_det_ref, atol=A_TOL, rtol=A_TOL)

    # multi-tile grid + batch padding path (batch not a multiple of the tile)
    batch2 = 20
    k_state2, k_eps2 = jax.random.split(jax.random.PRNGKey(1))
    state2 = jax.random.normal(k_state2, (batch2, state_dim), jnp.float32)
    eps2_full = jax.random.normal(k_eps2, (batch2, LANE), jnp.float32)
    a2, logp2 = actor_forward(state2, kparams, eps2_full,
                              deterministic=False, with_logprob=True, block_b=8)
    a2 = jax.block_until_ready(a2)
    logp2 = jax.block_until_ready(logp2)
    a2_ref, logp2_ref = actor_reference(state2, raw, eps2_full[:, :action_dim],
                                        deterministic=False, with_logprob=True)
    assert a2.shape == (batch2, action_dim) and logp2.shape == (batch2, 1)
    assert jnp.allclose(a2, a2_ref, atol=A_TOL, rtol=A_TOL)
    assert jnp.allclose(logp2, logp2_ref, atol=LP_ATOL, rtol=LP_RTOL)

    print("KERNEL_OK")
</pallas_src>

<mosaic_0001>
module attributes {stable_mosaic.version = 11 : i64} {
  func.func @_actor_kernel(%arg0: i32, %arg1: memref<8x16xf32, #tpu.memory_space<vmem>>, %arg2: memref<16x32xbf16, #tpu.memory_space<vmem>>, %arg3: memref<1x32xf32, #tpu.memory_space<vmem>>, %arg4: memref<32x32xbf16, #tpu.memory_space<vmem>>, %arg5: memref<1x32xf32, #tpu.memory_space<vmem>>, %arg6: memref<32x256xbf16, #tpu.memory_space<vmem>>, %arg7: memref<1x256xf32, #tpu.memory_space<vmem>>, %arg8: memref<8x128xf32, #tpu.memory_space<vmem>>, %arg9: memref<8x128xf32, #tpu.memory_space<vmem>>) attributes {dimension_semantics = [#tpu.dimension_semantics<parallel>], iteration_bounds = array<i64: 1>, scalar_prefetch = 0 : i64, scratch_operands = 0 : i64, tpu.core_type = #tpu.core_type<tc>, window_params = [{transform_indices = @transform_0, window_bounds = array<i64: 8, 16>}, {pipeline_mode = #tpu.pipeline_mode<synchronous>, transform_indices = @transform_1, window_bounds = array<i64: 16, 32>}, {pipeline_mode = #tpu.pipeline_mode<synchronous>, transform_indices = @transform_2, window_bounds = array<i64: 1, 32>}, {pipeline_mode = #tpu.pipeline_mode<synchronous>, transform_indices = @transform_3, window_bounds = array<i64: 32, 32>}, {pipeline_mode = #tpu.pipeline_mode<synchronous>, transform_indices = @transform_4, window_bounds = array<i64: 1, 32>}, {pipeline_mode = #tpu.pipeline_mode<synchronous>, transform_indices = @transform_5, window_bounds = array<i64: 32, 256>}, {pipeline_mode = #tpu.pipeline_mode<synchronous>, transform_indices = @transform_6, window_bounds = array<i64: 1, 256>}, {transform_indices = @transform_7, window_bounds = array<i64: 8, 128>}, {transform_indices = @transform_8, window_bounds = array<i64: 8, 128>}]} {
    %c0 = arith.constant 0 : index
    %c0_0 = arith.constant 0 : index
    %0 = vector.load %arg1[%c0, %c0_0] : memref<8x16xf32, #tpu.memory_space<vmem>>, vector<8x16xf32>
    %1 = arith.truncf %0 : vector<8x16xf32> to vector<8x16xbf16>
    %c0_1 = arith.constant 0 : index
    %c0_2 = arith.constant 0 : index
    %2 = vector.load %arg2[%c0_1, %c0_2] : memref<16x32xbf16, #tpu.memory_space<vmem>>, vector<16x32xbf16>
    %cst = arith.constant dense<0.000000e+00> : vector<8x32xf32>
    %3 = tpu.matmul %1, %2, %cst {dimension_numbers = #tpu.dot_dimension_numbers<[1], [0], [0], [1], [0, 0, 1, 1], [], []>} : vector<8x16xbf16>, vector<16x32xbf16>, vector<8x32xf32> -> vector<8x32xf32>
    %c0_3 = arith.constant 0 : index
    %c0_4 = arith.constant 0 : index
    %4 = vector.load %arg3[%c0_3, %c0_4] : memref<1x32xf32, #tpu.memory_space<vmem>>, vector<1x32xf32>
    %5 = vector.broadcast %4 : vector<1x32xf32> to vector<8x32xf32>
    %6 = arith.addf %3, %5 : vector<8x32xf32>
    %cst_5 = arith.constant 0.000000e+00 : f32
    %7 = vector.broadcast %cst_5 : f32 to vector<8x32xf32>
    %8 = arith.maximumf %6, %7 : vector<8x32xf32>
    %9 = arith.truncf %8 : vector<8x32xf32> to vector<8x32xbf16>
    %c0_6 = arith.constant 0 : index
    %c0_7 = arith.constant 0 : index
    %10 = vector.load %arg4[%c0_6, %c0_7] : memref<32x32xbf16, #tpu.memory_space<vmem>>, vector<32x32xbf16>
    %cst_8 = arith.constant dense<0.000000e+00> : vector<8x32xf32>
    %11 = tpu.matmul %9, %10, %cst_8 {dimension_numbers = #tpu.dot_dimension_numbers<[1], [0], [0], [1], [0, 0, 1, 1], [], []>} : vector<8x32xbf16>, vector<32x32xbf16>, vector<8x32xf32> -> vector<8x32xf32>
    %c0_9 = arith.constant 0 : index
    %c0_10 = arith.constant 0 : index
    %12 = vector.load %arg5[%c0_9, %c0_10] : memref<1x32xf32, #tpu.memory_space<vmem>>, vector<1x32xf32>
    %13 = vector.broadcast %12 : vector<1x32xf32> to vector<8x32xf32>
    %14 = arith.addf %11, %13 : vector<8x32xf32>
    %cst_11 = arith.constant 0.000000e+00 : f32
    %15 = vector.broadcast %cst_11 : f32 to vector<8x32xf32>
    %16 = arith.maximumf %14, %15 : vector<8x32xf32>
    %17 = arith.truncf %16 : vector<8x32xf32> to vector<8x32xbf16>
    %c0_12 = arith.constant 0 : index
    %c0_13 = arith.constant 0 : index
    %18 = vector.load %arg6[%c0_12, %c0_13] : memref<32x256xbf16, #tpu.memory_space<vmem>>, vector<32x256xbf16>
    %cst_14 = arith.constant dense<0.000000e+00> : vector<8x256xf32>
    %19 = tpu.matmul %17, %18, %cst_14 {dimension_numbers = #tpu.dot_dimension_numbers<[1], [0], [0], [1], [0, 0, 1, 1], [], []>} : vector<8x32xbf16>, vector<32x256xbf16>, vector<8x256xf32> -> vector<8x256xf32>
    %c0_15 = arith.constant 0 : index
    %c0_16 = arith.constant 0 : index
    %20 = vector.load %arg7[%c0_15, %c0_16] : memref<1x256xf32, #tpu.memory_space<vmem>>, vector<1x256xf32>
    %21 = vector.broadcast %20 : vector<1x256xf32> to vector<8x256xf32>
    %22 = arith.addf %19, %21 : vector<8x256xf32>
    %23 = vector.extract_strided_slice %22 {offsets = [0, 0], sizes = [8, 128], strides = [1, 1]} : vector<8x256xf32> to vector<8x128xf32>
    %24 = vector.extract_strided_slice %22 {offsets = [0, 128], sizes = [8, 128], strides = [1, 1]} : vector<8x256xf32> to vector<8x128xf32>
    %cst_17 = arith.constant -2.000000e+01 : f32
    %cst_18 = arith.constant 2.000000e+00 : f32
    %25 = vector.broadcast %cst_17 : f32 to vector<8x128xf32>
    %26 = arith.maximumf %25, %24 : vector<8x128xf32>
    %27 = vector.broadcast %cst_18 : f32 to vector<8x128xf32>
    %28 = arith.minimumf %27, %26 : vector<8x128xf32>
    %c0_19 = arith.constant 0 : index
    %c0_20 = arith.constant 0 : index
    %29 = vector.load %arg8[%c0_19, %c0_20] : memref<8x128xf32, #tpu.memory_space<vmem>>, vector<8x128xf32>
    %30 = math.exp %28 : vector<8x128xf32>
    %31 = arith.mulf %30, %29 : vector<8x128xf32>
    %32 = arith.addf %23, %31 : vector<8x128xf32>
    %33 = math.tanh %32 : vector<8x128xf32>
    %34 = tpu.iota {dimensions = array<i32: 1>} : vector<8x128xi32>
    %c4_i32 = arith.constant 4 : i32
    %35 = vector.broadcast %c4_i32 : i32 to vector<8x128xi32>
    %36 = arith.cmpi slt, %34, %35 : vector<8x128xi32>
    %cst_21 = arith.constant 0.000000e+00 : f32
    %37 = vector.broadcast %cst_21 : f32 to vector<8x128xf32>
    %38 = arith.select %36, %33, %37 : vector<8x128xi1>, vector<8x128xf32>
    %cst_22 = arith.constant -5.000000e-01 : f32
    %39 = vector.broadcast %cst_22 : f32 to vector<8x128xf32>
    %40 = arith.mulf %39, %29 : vector<8x128xf32>
    %41 = arith.mulf %40, %29 : vector<8x128xf32>
    %42 = arith.subf %41, %28 : vector<8x128xf32>
    %cst_23 = arith.constant 0.918938517 : f32
    %43 = vector.broadcast %cst_23 : f32 to vector<8x128xf32>
    %44 = arith.subf %42, %43 : vector<8x128xf32>
    %cst_24 = arith.constant 0.693147182 : f32
    %45 = vector.broadcast %cst_24 : f32 to vector<8x128xf32>
    %46 = arith.subf %45, %32 : vector<8x128xf32>
    %cst_25 = arith.constant -2.000000e+00 : f32
    %47 = vector.broadcast %cst_25 : f32 to vector<8x128xf32>
    %48 = arith.mulf %47, %32 : vector<8x128xf32>
    %cst_26 = arith.constant 0.000000e+00 : f32
    %49 = vector.broadcast %cst_26 : f32 to vector<8x128xf32>
    %50 = arith.maximumf %49, %48 : vector<8x128xf32>
    %51 = vector.broadcast %cst_26 : f32 to vector<8x128xf32>
    %52 = arith.subf %51, %48 : vector<8x128xf32>
    %53 = arith.cmpf one, %52, %52 : vector<8x128xf32>
    %54 = vector.broadcast %cst_26 : f32 to vector<8x128xf32>
    %55 = arith.addf %54, %48 : vector<8x128xf32>
    %56 = math.absf %52 : vector<8x128xf32>
    %cst_27 = arith.constant 0.000000e+00 : f32
    %57 = vector.broadcast %cst_27 : f32 to vector<8x128xf32>
    %58 = arith.subf %57, %56 : vector<8x128xf32>
    %59 = math.exp %58 : vector<8x128xf32>
    %60 = math.log1p %59 : vector<8x128xf32>
    %61 = arith.addf %50, %60 : vector<8x128xf32>
    %62 = arith.select %53, %55, %61 : vector<8x128xi1>, vector<8x128xf32>
    %63 = arith.subf %46, %62 : vector<8x128xf32>
    %cst_28 = arith.constant 2.000000e+00 : f32
    %64 = vector.broadcast %cst_28 : f32 to vector<8x128xf32>
    %65 = arith.mulf %64, %63 : vector<8x128xf32>
    %c4_i32_29 = arith.constant 4 : i32
    %66 = vector.broadcast %c4_i32_29 : i32 to vector<8x128xi32>
    %67 = arith.cmpi slt, %34, %66 : vector<8x128xi32>
    %68 = arith.subf %44, %65 : vector<8x128xf32>
    %cst_30 = arith.constant 0.000000e+00 : f32
    %69 = vector.broadcast %cst_30 : f32 to vector<8x128xf32>
    %70 = arith.select %67, %68, %69 : vector<8x128xi1>, vector<8x128xf32>
    %cst_31 = arith.constant dense<0.000000e+00> : vector<8xf32>
    %71 = vector.multi_reduction <add>, %70, %cst_31 [1] : vector<8x128xf32> to vector<8xf32>
    %72 = vector.shape_cast %71 : vector<8xf32> to vector<8x1xf32>
    %c4_i32_32 = arith.constant 4 : i32
    %73 = vector.broadcast %c4_i32_32 : i32 to vector<8x128xi32>
    %74 = arith.cmpi eq, %34, %73 : vector<8x128xi32>
    %75 = vector.shape_cast %72 : vector<8x1xf32> to vector<8x1xf32>
    %76 = vector.broadcast %75 : vector<8x1xf32> to vector<8x128xf32>
    %77 = arith.select %74, %76, %38 : vector<8x128xi1>, vector<8x128xf32>
    %c0_33 = arith.constant 0 : index
    %c0_34 = arith.constant 0 : index
    %78 = vector.load %arg9[%c0_33, %c0_34] : memref<8x128xf32, #tpu.memory_space<vmem>>, vector<8x128xf32>
    tpu.vector_store %arg9[%c0_33, %c0_34], %77 {strides = array<i32>} : memref<8x128xf32, #tpu.memory_space<vmem>>, vector<8x128xf32>,
    return
  }
  func.func @transform_0(%arg0: i32) -> (i32, i32) {
    %c0_i32 = arith.constant 0 : i32
    %c0_i32_0 = arith.constant 0 : i32
    return %arg0, %c0_i32 : i32, i32
  }
  func.func @transform_1(%arg0: i32) -> (i32, i32) {
    %c0_i32 = arith.constant 0 : i32
    %c0_i32_0 = arith.constant 0 : i32
    %c0_i32_1 = arith.constant 0 : i32
    return %c0_i32, %c0_i32_0 : i32, i32
  }
  func.func @transform_2(%arg0: i32) -> (i32, i32) {
    %c0_i32 = arith.constant 0 : i32
    %c0_i32_0 = arith.constant 0 : i32
    %c0_i32_1 = arith.constant 0 : i32
    return %c0_i32, %c0_i32_0 : i32, i32
  }
  func.func @transform_3(%arg0: i32) -> (i32, i32) {
    %c0_i32 = arith.constant 0 : i32
    %c0_i32_0 = arith.constant 0 : i32
    %c0_i32_1 = arith.constant 0 : i32
    return %c0_i32, %c0_i32_0 : i32, i32
  }
  func.func @transform_4(%arg0: i32) -> (i32, i32) {
    %c0_i32 = arith.constant 0 : i32
    %c0_i32_0 = arith.constant 0 : i32
    %c0_i32_1 = arith.constant 0 : i32
    return %c0_i32, %c0_i32_0 : i32, i32
  }
  func.func @transform_5(%arg0: i32) -> (i32, i32) {
    %c0_i32 = arith.constant 0 : i32
    %c0_i32_0 = arith.constant 0 : i32
    %c0_i32_1 = arith.constant 0 : i32
    return %c0_i32, %c0_i32_0 : i32, i32
  }
  func.func @transform_6(%arg0: i32) -> (i32, i32) {
    %c0_i32 = arith.constant 0 : i32
    %c0_i32_0 = arith.constant 0 : i32
    %c0_i32_1 = arith.constant 0 : i32
    return %c0_i32, %c0_i32_0 : i32, i32
  }
  func.func @transform_7(%arg0: i32) -> (i32, i32) {
    %c0_i32 = arith.constant 0 : i32
    %c0_i32_0 = arith.constant 0 : i32
    return %arg0, %c0_i32 : i32, i32
  }
  func.func @transform_8(%arg0: i32) -> (i32, i32) {
    %c0_i32 = arith.constant 0 : i32
    %c0_i32_0 = arith.constant 0 : i32
    return %arg0, %c0_i32 : i32, i32
  }
}

</mosaic_0001>

<llo_original>
// kernel: tpu_custom_call.1
$region0: #{tpu_custom_call.1}
  #allocation0 [shape = 'u32[]', space=smem, size = 0x4, offset = 0x4, fixed_abs, tag = 'smem constant byte address 0x4 - core index']
  #allocation1 [shape = 'u32[144,128]{1,0:T(1,128)}', space=vmem, size = 0x12000, scoped, tag = 'internal scratch']
  %s0 = inlined_call_operand.hbm [shape: f32[8,16], index: 0, kind: input, shape index: {}]
  %s1 = inlined_call_operand.hbm [shape: bf16[16,32], index: 1, kind: input, shape index: {}]
  %s2 = inlined_call_operand.vmem [shape: f32[1,32], index: 2, kind: input, shape index: {}]
  %s3 = inlined_call_operand.hbm [shape: bf16[32,32], index: 3, kind: input, shape index: {}]
  %s4 = inlined_call_operand.vmem [shape: f32[1,32], index: 4, kind: input, shape index: {}]
  %s5 = inlined_call_operand.hbm [shape: bf16[32,256], index: 5, kind: input, shape index: {}]
  %s6 = inlined_call_operand.vmem [shape: f32[1,256], index: 6, kind: input, shape index: {}]
  %s7 = inlined_call_operand.vmem [shape: f32[8,128], index: 7, kind: input, shape index: {}]
  %s8 = inlined_call_operand.hbm [shape: f32[8,128], index: 8, kind: output, shape index: {}]
  %s9 = sld [smem:[#allocation0]]
  $region58: #{tpu_custom_call.1} parent=0
    _
  %s11 = ssub.s32 1, %s9
  %s12 = scalar_select 0, %s11, %s9
  $region1: #{tpu_custom_call.1} parent=0
    #allocation2 [shape = 'u8[4096]{0}', space=vmem, size = 0x1000, scoped, tag = 'input window, operand 0, single buffered']
    #allocation3 [shape = 's32[1]{0}', space=sflag, size = 0x4, scoped, tag = 'scoped memory for tpu_custom_call.1']
    #allocation4 [shape = 's32[1]{0}', space=sflag, size = 0x4, scoped, tag = 'scoped memory for tpu_custom_call.1']
    #allocation5 [shape = 'u8[4096]{0}', space=vmem, size = 0x1000, scoped, tag = 'input window, operand 1, single buffered']
    #allocation6 [shape = 's32[1]{0}', space=sflag, size = 0x4, scoped, tag = 'scoped memory for tpu_custom_call.1']
    #allocation7 [shape = 'u8[8192]{0}', space=vmem, size = 0x2000, scoped, tag = 'input window, operand 3, single buffered']
    #allocation8 [shape = 'u8[16384]{0}', space=vmem, size = 0x4000, scoped, tag = 'input window, operand 5, single buffered']
    #allocation9 [shape = 's32[1]{0}', space=sflag, size = 0x4, scoped, tag = 'scoped memory for tpu_custom_call.1']
    #allocation10 [shape = 'u8[4096]{0}', space=vmem, size = 0x1000, scoped, tag = 'output window, operand 0, single buffered']
    %13 = vsyncpa [#allocation3], 0
    %14 = vsyncpa [#allocation6], 0
    %15 = vsyncpa [#allocation9], 0
    %16 = vsyncpa [#allocation4], 0
    // Predicated region
    $region2: #{tpu_custom_call.1} parent=1 // pred_check
      _
    $region3: #{tpu_custom_call.1} parent=1 // pred_check_branch
      %18 = sbr.rel (0) target = $region5
    $region4: #{tpu_custom_call.1} parent=1 // pred_region
      %s20 = ssub.s32 128, 128
      %21 = vsyncadd [#allocation3], %s20
      %s23 = sshll.u32 [#allocation2], 4
      %s24 = int_to_ptr.vmem [resolvable:$true] %s23
      %26 = dma.hbm_to_vmem [thread:$0]  %s0, 128, %s24, [#allocation3]
    $region5: #{tpu_custom_call.1} parent=1 // pred_fallthru
      _
    // Predicated region
    $region6: #{tpu_custom_call.1} parent=1 // pred_check
      _
    $region7: #{tpu_custom_call.1} parent=1 // pred_check_branch
      %28 = sbr.rel (0) target = $region9
    $region8: #{tpu_custom_call.1} parent=1 // pred_region
      %s30 = ssub.s32 128, 128
      %31 = vsyncadd [#allocation6], %s30
      %s32 = sshll.u32 [#allocation5], 4
      %s33 = int_to_ptr.vmem [resolvable:$true] %s32
      %38 = dma.hbm_to_vmem [thread:$0]  %s1, 128, %s33, [#allocation6], 64, 64, 4
    $region9: #{tpu_custom_call.1} parent=1 // pred_fallthru
      _
    // Predicated region
    $region10: #{tpu_custom_call.1} parent=1 // pred_check
      _
    $region11: #{tpu_custom_call.1} parent=1 // pred_check_branch
      %40 = sbr.rel (0) target = $region13
    $region12: #{tpu_custom_call.1} parent=1 // pred_region
      _
    $region13: #{tpu_custom_call.1} parent=1 // pred_fallthru
      _
    // Predicated region
    $region14: #{tpu_custom_call.1} parent=1 // pred_check
      _
    $region15: #{tpu_custom_call.1} parent=1 // pred_check_branch
      %42 = sbr.rel (0) target = $region17
    $region16: #{tpu_custom_call.1} parent=1 // pred_region
      %s44 = ssub.s32 256, 256
      %45 = vsyncadd [#allocation6], %s44
      %s46 = sshll.u32 [#allocation7], 4
      %s47 = int_to_ptr.vmem [resolvable:$true] %s46
      %52 = dma.hbm_to_vmem [thread:$0]  %s3, 256, %s47, [#allocation6], 64, 64, 4
    $region17: #{tpu_custom_call.1} parent=1 // pred_fallthru
      _
    // Predicated region
    $region18: #{tpu_custom_call.1} parent=1 // pred_check
      _
    $region19: #{tpu_custom_call.1} parent=1 // pred_check_branch
      %54 = sbr.rel (0) target = $region21
    $region20: #{tpu_custom_call.1} parent=1 // pred_region
      _
    $region21: #{tpu_custom_call.1} parent=1 // pred_fallthru
      _
    // Predicated region
    $region22: #{tpu_custom_call.1} parent=1 // pred_check
      _
    $region23: #{tpu_custom_call.1} parent=1 // pred_check_branch
      %56 = sbr.rel (0) target = $region25
    $region24: #{tpu_custom_call.1} parent=1 // pred_region
      %s58 = ssub.s32 512, 512
      %59 = vsyncadd [#allocation9], %s58
      %s60 = sshll.u32 [#allocation8], 4
      %s61 = int_to_ptr.vmem [resolvable:$true] %s60
      %66 = dma.hbm_to_vmem [thread:$0]  %s5, 512, %s61, [#allocation9], 128, 128, 8
    $region25: #{tpu_custom_call.1} parent=1 // pred_fallthru
      _
    // Predicated region
    $region26: #{tpu_custom_call.1} parent=1 // pred_check
      _
    $region27: #{tpu_custom_call.1} parent=1 // pred_check_branch
      %68 = sbr.rel (0) target = $region29
    $region28: #{tpu_custom_call.1} parent=1 // pred_region
      _
    $region29: #{tpu_custom_call.1} parent=1 // pred_fallthru
      _
    // Predicated region
    $region30: #{tpu_custom_call.1} parent=1 // pred_check
      _
    $region31: #{tpu_custom_call.1} parent=1 // pred_check_branch
      %70 = sbr.rel (0) target = $region33
    $region32: #{tpu_custom_call.1} parent=1 // pred_region
      _
    $region33: #{tpu_custom_call.1} parent=1 // pred_fallthru
      _
    // Predicated region
    $region34: #{tpu_custom_call.1} parent=1 // pred_check
      _
    $region35: #{tpu_custom_call.1} parent=1 // pred_check_branch
      %72 = sbr.rel (0) target = $region37
    $region36: #{tpu_custom_call.1} parent=1 // pred_region
      %73 = dma.done [#allocation3], 128
    $region37: #{tpu_custom_call.1} parent=1 // pred_fallthru
      _
    // Predicated region
    $region38: #{tpu_custom_call.1} parent=1 // pred_check
      _
    $region39: #{tpu_custom_call.1} parent=1 // pred_check_branch
      %75 = sbr.rel (0) target = $region41
    $region40: #{tpu_custom_call.1} parent=1 // pred_region
      %76 = dma.done [#allocation6], 128
    $region41: #{tpu_custom_call.1} parent=1 // pred_fallthru
      _
    // Predicated region
    $region42: #{tpu_custom_call.1} parent=1 // pred_check
      _
    $region43: #{tpu_custom_call.1} parent=1 // pred_check_branch
      %78 = sbr.rel (0) target = $region45
    $region44: #{tpu_custom_call.1} parent=1 // pred_region
      %79 = dma.done [#allocation6], 256
    $region45: #{tpu_custom_call.1} parent=1 // pred_fallthru
      _
    // Predicated region
    $region46: #{tpu_custom_call.1} parent=1 // pred_check
      _
    $region47: #{tpu_custom_call.1} parent=1 // pred_check_branch
      %81 = sbr.rel (0) target = $region49
    $region48: #{tpu_custom_call.1} parent=1 // pred_region
      %82 = dma.done [#allocation9], 512
    $region49: #{tpu_custom_call.1} parent=1 // pred_fallthru
      _
    %v84 = vld [vmem:[#allocation2] sm:$0xff]
    %v85 = vpack.c.bf16 %v84, %v84
    %v86 = vld [vmem:[#allocation5] sm:$0xf]
    %v87 = vld [vmem:[#allocation5 + $0x4] sm:$0xf]
    %v88 = vld [vmem:[%s2] sm:$0x1]
    %v90 = vlaneseq
    %v91 = vshrl.u32 %v90, 7
    %v92 = vsub.s32 0, %v91
    %v93 = vrot.slane %v88, %v92
    %v97 = vunpack.c.l.b16 %v86
    %v98 = vunpack.c.l.b16 %v87
    %v99 = vpack.c.b16 %v98, %v97
    %vm101 = vcmask 130048
    %v103 = vsel %vm101, %v85, 0
    %105 = vmatprep.subr.bf16.mxu0 0
    %106 = vmatpush1.bf16.msra.mxu0 %v99
    %107 = vmatprep.subr.bf16.mxu0 0
    %108 = vmatpush1.bf16.msra.mxu0 0
    %109 = vmatprep.subr.bf16.mxu0 0
    %110 = vmatpush1.bf16.msra.mxu0 0
    %111 = vmatprep.subr.bf16.mxu0 0
    %112 = vmatpush1.bf16.msra.mxu0 0
    %113 = vmatprep.subr.bf16.mxu0 0
    %114 = vmatpush1.bf16.msra.mxu0 0
    %115 = vmatprep.subr.bf16.mxu0 0
    %116 = vmatpush1.bf16.msra.mxu0 0
    %117 = vmatprep.subr.bf16.mxu0 0
    %118 = vmatpush1.bf16.msra.mxu0 0
    %119 = vmatprep.subr.bf16.mxu0 0
    %120 = vmatpush1.bf16.msra.mxu0 0
    %121 = vmatprep.subr.bf16.mxu0 0
    %122 = vmatpush1.bf16.msra.mxu0 0
    %123 = vmatprep.subr.bf16.mxu0 0
    %124 = vmatpush1.bf16.msra.mxu0 0
    %125 = vmatprep.subr.bf16.mxu0 0
    %126 = vmatpush1.bf16.msra.mxu0 0
    %127 = vmatprep.subr.bf16.mxu0 0
    %128 = vmatpush1.bf16.msra.mxu0 0
    %129 = vmatprep.subr.bf16.mxu0 0
    %130 = vmatpush1.bf16.msra.mxu0 0
    %131 = vmatprep.subr.bf16.mxu0 0
    %132 = vmatpush1.bf16.msra.mxu0 0
    %133 = vmatprep.subr.bf16.mxu0 0
    %134 = vmatpush1.bf16.msra.mxu0 0
    %135 = vmatprep.subr.bf16.mxu0 0
    %136 = vmatpush1.bf16.msra.mxu0 0
    %137 = vmatprep.mubr.bf16.mxu0 0
    %138 = vmatmul.mubr.bf16.gmra.mrb[0].mxu0 %v103
    %v139 = vpop.f32.mrb[0].mxu0
    %v140 = vadd.f32 %v93, %v139
    %v141 = vpop.f32.mrb[0].mxu0
    %v142 = vpop.f32.mrb[0].mxu0
    %v143 = vpop.f32.mrb[0].mxu0
    %144 = vdwg.mxu0
    %v145 = vmax.f32 %v140, 0.0
    %v146 = vpack.c.bf16 %v145, %v145
    %v147 = vld [vmem:[#allocation7] sm:$0xf]
    %v148 = vld [vmem:[#allocation7 + $0x4] sm:$0xf]
    %v149 = vld [vmem:[#allocation7 + $0x8] sm:$0xf]
    %v150 = vld [vmem:[#allocation7 + $0xc] sm:$0xf]
    %v151 = vld [vmem:[%s4] sm:$0x1]
    %v153 = vlaneseq
    %v154 = vshrl.u32 %v153, 7
    %v155 = vsub.s32 0, %v154
    %v156 = vrot.slane %v151, %v155
    %v162 = vunpack.c.l.b16 %v147
    %v163 = vunpack.c.l.b16 %v148
    %v164 = vunpack.c.l.b16 %v149
    %v165 = vunpack.c.l.b16 %v150
    %v166 = vpack.c.b16 %v163, %v162
    %v167 = vpack.c.b16 %v165, %v164
    %vm170 = vcmask 261120
    %v172 = vsel %vm170, %v146, 0
    %174 = vmatprep.subr.bf16.mxu0 0
    %175 = vmatpush1.bf16.msra.mxu0 %v166
    %176 = vmatprep.subr.bf16.mxu0 0
    %177 = vmatpush1.bf16.msra.mxu0 %v167
    %178 = vmatprep.subr.bf16.mxu0 0
    %179 = vmatpush1.bf16.msra.mxu0 0
    %180 = vmatprep.subr.bf16.mxu0 0
    %181 = vmatpush1.bf16.msra.mxu0 0
    %182 = vmatprep.subr.bf16.mxu0 0
    %183 = vmatpush1.bf16.msra.mxu0 0
    %184 = vmatprep.subr.bf16.mxu0 0
    %185 = vmatpush1.bf16.msra.mxu0 0
    %186 = vmatprep.subr.bf16.mxu0 0
    %187 = vmatpush1.bf16.msra.mxu0 0
    %188 = vmatprep.subr.bf16.mxu0 0
    %189 = vmatpush1.bf16.msra.mxu0 0
    %190 = vmatprep.subr.bf16.mxu0 0
    %191 = vmatpush1.bf16.msra.mxu0 0
    %192 = vmatprep.subr.bf16.mxu0 0
    %193 = vmatpush1.bf16.msra.mxu0 0
    %194 = vmatprep.subr.bf16.mxu0 0
    %195 = vmatpush1.bf16.msra.mxu0 0
    %196 = vmatprep.subr.bf16.mxu0 0
    %197 = vmatpush1.bf16.msra.mxu0 0
    %198 = vmatprep.subr.bf16.mxu0 0
    %199 = vmatpush1.bf16.msra.mxu0 0
    %200 = vmatprep.subr.bf16.mxu0 0
    %201 = vmatpush1.bf16.msra.mxu0 0
    %202 = vmatprep.subr.bf16.mxu0 0
    %203 = vmatpush1.bf16.msra.mxu0 0
    %204 = vmatprep.subr.bf16.mxu0 0
    %205 = vmatpush1.bf16.msra.mxu0 0
    %206 = vmatprep.mubr.bf16.mxu0 0
    %207 = vmatmul.mubr.bf16.gmra.mrb[0].mxu0 %v172
    %v208 = vpop.f32.mrb[0].mxu0
    %v209 = vadd.f32 %v156, %v208
    %v210 = vpop.f32.mrb[0].mxu0
    %v211 = vpop.f32.mrb[0].mxu0
    %v212 = vpop.f32.mrb[0].mxu0
    %213 = vdwg.mxu0
    %v214 = vmax.f32 %v209, 0.0
    %v215 = vpack.c.bf16 %v214, %v214
    %v216 = vld [vmem:[#allocation8] sm:$0xff]
    %v217 = vld [vmem:[#allocation8 + $0x8] sm:$0xff]
    %v218 = vld [vmem:[#allocation8 + $0x10] sm:$0xff]
    %v219 = vld [vmem:[#allocation8 + $0x18] sm:$0xff]
    %v220 = vld [vmem:[%s6] sm:$0x3]
    %v222 = vlaneseq
    %v223 = vshrl.u32 %v222, 7
    %v224 = vsub.s32 0, %v223
    %v225 = vrot.slane %v220, %v224
    %v226 = vlaneseq
    %v227 = vshrl.u32 %v226, 7
    %v228 = vsub.s32 1, %v227
    %v229 = vrot.slane %v220, %v228
    %v236 = vunpack.c.l.b16 %v216
    %v237 = vunpack.c.h.b16 %v216
    %v238 = vunpack.c.l.b16 %v217
    %v239 = vunpack.c.h.b16 %v217
    %v240 = vunpack.c.l.b16 %v218
    %v241 = vunpack.c.h.b16 %v218
    %v242 = vunpack.c.l.b16 %v219
    %v243 = vunpack.c.h.b16 %v219
    %v244 = vpack.c.b16 %v238, %v236
    %v245 = vpack.c.b16 %v239, %v237
    %v246 = vpack.c.b16 %v242, %v240
    %v247 = vpack.c.b16 %v243, %v241
    %v253 = vsel %vm170, %v215, 0
    %255 = vmatprep.subr.bf16.mxu0 %v245
    %256 = vmatpush1.bf16.msra.mxu0 %v244
    %257 = vmatprep.subr.bf16.mxu0 %v247
    %258 = vmatpush1.bf16.msra.mxu0 %v246
    %259 = vmatprep.subr.bf16.mxu0 0
    %260 = vmatpush1.bf16.msra.mxu0 0
    %261 = vmatprep.subr.bf16.mxu0 0
    %262 = vmatpush1.bf16.msra.mxu0 0
    %263 = vmatprep.subr.bf16.mxu0 0
    %264 = vmatpush1.bf16.msra.mxu0 0
    %265 = vmatprep.subr.bf16.mxu0 0
    %266 = vmatpush1.bf16.msra.mxu0 0
    %267 = vmatprep.subr.bf16.mxu0 0
    %268 = vmatpush1.bf16.msra.mxu0 0
    %269 = vmatprep.subr.bf16.mxu0 0
    %270 = vmatpush1.bf16.msra.mxu0 0
    %271 = vmatprep.subr.bf16.mxu0 0
    %272 = vmatpush1.bf16.msra.mxu0 0
    %273 = vmatprep.subr.bf16.mxu0 0
    %274 = vmatpush1.bf16.msra.mxu0 0
    %275 = vmatprep.subr.bf16.mxu0 0
    %276 = vmatpush1.bf16.msra.mxu0 0
    %277 = vmatprep.subr.bf16.mxu0 0
    %278 = vmatpush1.bf16.msra.mxu0 0
    %279 = vmatprep.subr.bf16.mxu0 0
    %280 = vmatpush1.bf16.msra.mxu0 0
    %281 = vmatprep.subr.bf16.mxu0 0
    %282 = vmatpush1.bf16.msra.mxu0 0
    %283 = vmatprep.subr.bf16.mxu0 0
    %284 = vmatpush1.bf16.msra.mxu0 0
    %285 = vmatprep.subr.bf16.mxu0 0
    %286 = vmatpush1.bf16.msra.mxu0 0
    %287 = vmatprep.mubr.bf16.mxu0 0
    %288 = vmatmul.mubr.bf16.gmra.mrb[0].mxu0 %v253
    %v289 = vpop.f32.mrb[0].mxu0
    %v290 = vadd.f32 %v225, %v289
    %v291 = vpop.f32.mrb[0].mxu0
    %v292 = vadd.f32 %v229, %v291
    %v293 = vpop.f32.mrb[0].mxu0
    %v294 = vpop.f32.mrb[0].mxu0
    %295 = vdwg.mxu0
    %v296 = vmax.f32 %v292, -20.0
    %v297 = vmin.f32 %v296, 2.0
    %v298 = vld [vmem:[%s7] sm:$0xff]
    %v299 = vmul.f32 %v297, 1.442695
    %v300 = vpow.pop %v299
    %v301 = vmul.f32 %v300, %v298
    %v302 = vadd.f32 %v290, %v301
    %v303 = vtanh.pop %v302
    %v304 = vlaneseq
    %v305 = vand.u32 %v304, 127
    %vm306 = vcmp.lt.s32.totalorder %v305, 4
    %v307 = vsel %vm306, %v303, 0.0
    %v308 = vmul.f32 %v298, -0.5
    %v309 = vmul.f32 %v308, %v298
    %v310 = vsub.f32 %v309, %v297
    %v311 = vsub.f32 %v310, 0.9189385
    %v312 = vsub.f32 0.6931472, %v302
    %v313 = vmul.f32 %v302, -2.0
    %v314 = vmax.f32 %v313, 0.0
    %v315 = vsub.f32 0.0, %v313
    %vm316 = vcmp.ne.f32.partialorder %v315, %v315
    %v317 = vadd.f32 %v313, 0.0
    %v318 = vand.u32 2147483647, %v315
    %v319 = vsub.f32 0.0, %v318
    %v320 = vmul.f32 %v319, 1.442695
    %v321 = vpow.pop %v320
    %v322 = vadd.f32 %v321, 1.0
    %v323 = vlog2.pop %v322
    %v324 = vmul.f32 %v323, 0.6931472
    %v325 = vmul.f32 -0.5, %v321
    %v326 = vadd.f32 %v325, 1.0
    %v327 = vmul.f32 %v326, %v321
    %v328 = vand.u32 2147483647, %v321
    %vm329 = vcmp.lt.f32.partialorder %v328, 0.0004427343
    %v330 = vsel %vm329, %v327, %v324
    %v331 = vadd.f32 %v314, %v330
    %v332 = vsel %vm316, %v317, %v331
    %v333 = vsub.f32 %v312, %v332
    %v334 = vmul.f32 %v333, 2.0
    %v335 = vsub.f32 %v311, %v334
    %v336 = vsel %vm306, %v335, 0.0
    %337 = vadd.xlane.f32.xlu0 %v336
    %v338 = vpop.xlane.xlu0 %337
    %vm339 = vcmp.eq.s32.totalorder %v305, 4
    %v340 = vsel %vm339, %v338, %v307
    %341 = vst [vmem:[#allocation10] sm:$0xff] %v340
    // Predicated region
    $region50: #{tpu_custom_call.1} parent=1 // pred_check
      _
    $region51: #{tpu_custom_call.1} parent=1 // pred_check_branch
      %343 = sbr.rel (0) target = $region53
    $region52: #{tpu_custom_call.1} parent=1 // pred_region
      %s345 = ssub.s32 128, 128
      %346 = vsyncadd [#allocation4], %s345
      %s348 = sshll.u32 [#allocation10], 4
      %s349 = int_to_ptr.vmem [resolvable:$true] %s348
      %351 = dma.vmem_to_hbm [thread:$0]  %s349, 128, %s8, [#allocation4]
    $region53: #{tpu_custom_call.1} parent=1 // pred_fallthru
      _
    // Predicated region
    $region54: #{tpu_custom_call.1} parent=1 // pred_check
      _
    $region55: #{tpu_custom_call.1} parent=1 // pred_check_branch
      %353 = sbr.rel (0) target = $region57
    $region56: #{tpu_custom_call.1} parent=1 // pred_region
      %354 = dma.done [#allocation4], 128
    $region57: #{tpu_custom_call.1} parent=1 // pred_fallthru
      _
    %355 = vsyncpa [#allocation3], 1
    %356 = vsyncpa [#allocation6], 1
    %357 = vsyncpa [#allocation9], 1
    %358 = vsyncpa [#allocation4], 1

</llo_original>
